<compile_context>
chip_gen: v7x
topology: tpu7x:2x2x1
jax: 0.10.0
libtpu: 0.0.40
codegen_flags: <defaults>
</compile_context>

<pallas_src>
import math
import functools

import jax
import jax.numpy as jnp
from jax.experimental import pallas as pl
from jax.experimental.pallas import tpu as pltpu


LANE = 128  # TPU lane width


# ----------------------------------------------------------------------------
# Deterministic parameter construction (gaussian orthogonal random features)
# ----------------------------------------------------------------------------
def gaussian_orthogonal_random_matrix(key, nb_rows, nb_columns, scaling=0):
    nb_full_blocks = nb_rows // nb_columns
    keys = jax.random.split(key, nb_full_blocks + 2)
    blocks = []
    for i in range(nb_full_blocks):
        unstructured = jax.random.normal(keys[i], (nb_columns, nb_columns), jnp.float32)
        q, _ = jnp.linalg.qr(unstructured)
        blocks.append(q.T)
    remaining = nb_rows - nb_full_blocks * nb_columns
    if remaining > 0:
        unstructured = jax.random.normal(
            keys[nb_full_blocks], (nb_columns, nb_columns), jnp.float32
        )
        q, _ = jnp.linalg.qr(unstructured)
        blocks.append(q.T[:remaining])
    final_matrix = jnp.concatenate(blocks, axis=0)
    if scaling == 0:
        multiplier = jnp.linalg.norm(
            jax.random.normal(keys[-1], (nb_rows, nb_columns), jnp.float32), axis=1
        )
    elif scaling == 1:
        multiplier = math.sqrt(float(nb_columns)) * jnp.ones((nb_rows,), jnp.float32)
    else:
        raise ValueError(f"Invalid scaling {scaling}")
    return multiplier[:, None] * final_matrix


# ----------------------------------------------------------------------------
# Pallas kernel: softmax-kernel feature map + linear attention for G heads
# ----------------------------------------------------------------------------
def _fast_attention_kernel(proj_ref, q_ref, k_ref, v_ref, o_ref, *,
                           m_valid, ratio, kernel_eps):
    q = q_ref[...].astype(jnp.float32)          # (G, N, D)
    k = k_ref[...].astype(jnp.float32)          # (G, N, D)
    v = v_ref[...].astype(jnp.float32)          # (G, N, D)
    proj_t = proj_ref[...]                      # (D, M_pad) bf16, pre-scaled + transposed

    g, n, d = q.shape
    m_pad = proj_t.shape[-1]
    inv_sqrt_d = float(d) ** (-0.5)             # == data_normalizer ** 2
    log_ratio = math.log(ratio)
    eps_scaled = ratio * kernel_eps

    # Two feature matmuls sharing the same small RHS (bf16 operands, f32 accumulation).
    # No concat/slice materialization; reshapes over leading dims are layout-free.
    q_bf = q.reshape(g * n, d).astype(jnp.bfloat16)
    k_bf = k.reshape(g * n, d).astype(jnp.bfloat16)
    q_dash = jnp.dot(q_bf, proj_t,
                     preferred_element_type=jnp.float32).reshape(g, n, m_pad)
    k_dash = jnp.dot(k_bf, proj_t,
                     preferred_element_type=jnp.float32).reshape(g, n, m_pad)

    # Mask out lane padding (only when nb_features is not a multiple of 128).
    if m_valid < m_pad:
        lane = jax.lax.broadcasted_iota(jnp.int32, (1, 1, m_pad), 2)
        valid = lane < m_valid
        neg = jnp.float32(-1e30)
        q_dash = jnp.where(valid, q_dash, neg)
        k_dash = jnp.where(valid, k_dash, neg)
    else:
        valid = None

    # Elementwise math stays f32 (v5e has no bf16 VPU/EUP path).
    q_diag = jnp.sum(q * q, axis=-1, keepdims=True) * (0.5 * inv_sqrt_d)  # (G, N, 1)
    k_diag = jnp.sum(k * k, axis=-1, keepdims=True) * (0.5 * inv_sqrt_d)  # (G, N, 1)

    q_max = jnp.max(q_dash, axis=-1, keepdims=True)                        # (G, N, 1)
    k_max = jnp.max(jnp.max(k_dash, axis=-1, keepdims=True),
                    axis=1, keepdims=True)                                 # (G, 1, 1)

    # ratio * (exp(z) + eps) == exp(z + log(ratio)) + ratio*eps
    q_prime = jnp.exp(q_dash - q_diag - q_max + log_ratio) + eps_scaled    # (G, N, M_pad)
    k_prime = jnp.exp(k_dash - k_diag - k_max + log_ratio) + eps_scaled    # (G, N, M_pad)
    if valid is not None:
        q_prime = jnp.where(valid, q_prime, 0.0)
        k_prime = jnp.where(valid, k_prime, 0.0)

    # linear_attention(q', k', v) with k_cumsum / denom folded into the MXU matmuls
    # via a ones column on v:  context[..., D] == k_cumsum,  out_ext[..., D] == denom.
    v_ext = jnp.concatenate([v, jnp.ones((g, n, 1), jnp.float32)], axis=-1)  # (G,N,D+1)
    q_prime_bf = q_prime.astype(jnp.bfloat16)
    k_prime_bf = k_prime.astype(jnp.bfloat16)
    v_ext_bf = v_ext.astype(jnp.bfloat16)

    context = jnp.einsum("gnm,gnd->gmd", k_prime_bf, v_ext_bf,
                         preferred_element_type=jnp.float32)               # (G, M_pad, D+1)
    out_ext = jnp.einsum("gnm,gmd->gnd", q_prime_bf,
                         context.astype(jnp.bfloat16),
                         preferred_element_type=jnp.float32)               # (G, N, D+1)

    out = out_ext[..., :d]                                                  # (G, N, D)
    denom = out_ext[..., d:]                                                # (G, N, 1)
    denom = jnp.where(denom == 0.0, jnp.float32(1e-5), denom)
    denom_inv = pl.reciprocal(denom, approx=True)                           # EUP vrcp
    o_ref[...] = (out * denom_inv).astype(o_ref.dtype)


# ----------------------------------------------------------------------------
# Wrapper: VMEM budget, grouping heuristic, projection preparation, pallas_call
# ----------------------------------------------------------------------------
def _vmem_limit_bytes():
    """Generation-aware scoped VMEM limit (physical minus headroom, clamped)."""
    try:
        cap = int(pltpu.get_tpu_info().vmem_capacity_bytes)
    except Exception:
        cap = 64 * 1024 * 1024
    return int(min(max(cap - 32 * 1024 * 1024, 16 * 1024 * 1024), 100 * 1024 * 1024))


def _pick_group_size(bh, n, d, m_pad, vmem_budget_bytes, target_rows=512):
    """Group size: saturate MXU rows, keep >=2 grid steps, stay under the VMEM budget."""
    # ~512 LHS rows in the fused feature matmuls (2*G*N rows total) saturates the MXU.
    g_rows = max(1, target_rows // max(2 * n, 1))
    # Rough per-head working set (f32 unless noted), incl. double-buffered blocks.
    d_lane = max(d + 1, LANE)
    per_head = (
        2 * 4 * 4 * n * d            # q/k/v/out block tiles, double-buffered
        + 4 * 4 * n * m_pad          # q_dash/k_dash/q_prime/k_prime
        + 2 * 2 * n * m_pad          # bf16 copies of q'/k'
        + 2 * 4 * m_pad * d_lane     # context (+ bf16 copy headroom)
        + 4 * 4 * n * d_lane         # out_ext + slices
    )
    g_vmem = max(1, int((vmem_budget_bytes // 2) // max(per_head, 1)))  # 2x slack
    # >= 2 grid steps: keeps both v7x TensorCores busy and preserves double-buffering.
    g_grid = bh if bh < 2 else bh // 2
    cap = max(1, min(bh, g_rows, g_vmem, g_grid))
    for g_try in range(cap, 0, -1):
        if bh % g_try == 0:
            return g_try
    return 1


def prepare_projection(projection_matrix):
    """(M, D) -> pre-scaled, pre-transposed, lane-padded (D, M_pad) bfloat16."""
    m, d = projection_matrix.shape
    data_normalizer = float(d) ** (-0.25)
    proj_t = (projection_matrix.astype(jnp.float32) * data_normalizer).T  # (D, M)
    m_pad = ((m + LANE - 1) // LANE) * LANE
    if m_pad > m:
        proj_t = jnp.pad(proj_t, ((0, 0), (0, m_pad - m)))
    return proj_t.astype(jnp.bfloat16), m


def fast_attention_pallas(q, k, v, proj_t_scaled, nb_features, kernel_eps=1e-4):
    """q, k, v: (B, H, N, D) float32; proj_t_scaled: (D, M_pad) bf16 pre-scaled/padded."""
    B, H, N, D = q.shape
    Dp, M_pad = proj_t_scaled.shape
    assert Dp == D, "projection head-dim mismatch"
    BH = B * H
    vmem_limit = _vmem_limit_bytes()
    G = _pick_group_size(BH, N, D, M_pad, vmem_limit)

    qf = q.reshape(BH, N, D)
    kf = k.reshape(BH, N, D)
    vf = v.reshape(BH, N, D)

    ratio = float(nb_features) ** (-0.5)
    kernel = functools.partial(
        _fast_attention_kernel,
        m_valid=int(nb_features), ratio=ratio, kernel_eps=float(kernel_eps),
    )

    cost = pl.CostEstimate(
        flops=8 * BH * N * M_pad * D,
        transcendentals=2 * BH * N * M_pad,
        bytes_accessed=4 * (4 * BH * N * D) + 2 * D * M_pad,
    )

    out = pl.pallas_call(
        kernel,
        out_shape=jax.ShapeDtypeStruct((BH, N, D), q.dtype),
        grid_spec=pltpu.PrefetchScalarGridSpec(
            num_scalar_prefetch=0,
            grid=(BH // G,),
            in_specs=[
                # Block index is (0, 0) every step -> Pallas skips the redundant re-DMA.
                pl.BlockSpec((D, M_pad), lambda i: (0, 0)),      # shared projection
                pl.BlockSpec((G, N, D), lambda i: (i, 0, 0)),    # q  group of heads
                pl.BlockSpec((G, N, D), lambda i: (i, 0, 0)),    # k
                pl.BlockSpec((G, N, D), lambda i: (i, 0, 0)),    # v
            ],
            out_specs=pl.BlockSpec((G, N, D), lambda i: (i, 0, 0)),
        ),
        compiler_params=pltpu.CompilerParams(
            dimension_semantics=("parallel",),
            vmem_limit_bytes=vmem_limit,
        ),
        cost_estimate=cost,
    )(proj_t_scaled, qf, kf, vf)
    return out.reshape(B, H, N, D)


# ----------------------------------------------------------------------------
# Pure-JAX reference (mirrors the PyTorch code) for correctness checking
# ----------------------------------------------------------------------------
def _softmax_kernel_ref(data, projection_matrix, is_query, eps=1e-4):
    d = data.shape[-1]
    data_normalizer = d ** (-0.25)
    ratio = projection_matrix.shape[0] ** (-0.5)
    data_dash = jnp.einsum("bhid,jd->bhij", data_normalizer * data, projection_matrix)
    diag_data = jnp.sum(data ** 2, axis=-1) / 2.0 * data_normalizer ** 2
    diag_data = diag_data[..., None]
    if is_query:
        amax = jnp.max(data_dash, axis=-1, keepdims=True)
    else:
        amax = jnp.max(data_dash, axis=(-1, -2), keepdims=True)
    return ratio * (jnp.exp(data_dash - diag_data - amax) + eps)


def _linear_attention_ref(q, k, v):
    k_cumsum = jnp.sum(k, axis=-2)
    D = jnp.einsum("bhnd,bhd->bhn", q, k_cumsum)
    D = jnp.where(D == 0.0, 1e-5, D)
    D_inv = 1.0 / D
    context = jnp.einsum("bhnd,bhne->bhde", k, v)
    return jnp.einsum("bhde,bhnd,bhn->bhne", context, q, D_inv)


def fast_attention_ref(q, k, v, projection_matrix):
    qp = _softmax_kernel_ref(q, projection_matrix, is_query=True)
    kp = _softmax_kernel_ref(k, projection_matrix, is_query=False)
    return _linear_attention_ref(qp, kp, v)


# ----------------------------------------------------------------------------
# FastAttention module + ProjectionUpdater bookkeeping (plain Python/JAX)
# ----------------------------------------------------------------------------
class FastAttentionModule:
    def __init__(self, dim_heads, nb_features=None, key=None):
        if nb_features is None:
            nb_features = int(dim_heads * math.log(dim_heads))
        self.dim_heads = dim_heads
        self.nb_features = nb_features
        self.projection_matrix = gaussian_orthogonal_random_matrix(
            key, nb_features, dim_heads, scaling=0
        )
        self._refresh_prepared()

    def _refresh_prepared(self):
        # Pre-scale / pre-transpose / lane-pad / bf16-cast once per redraw.
        self._proj_t_scaled, _ = prepare_projection(self.projection_matrix)

    def redraw_projection_matrix(self, key):
        self.projection_matrix = gaussian_orthogonal_random_matrix(
            key, self.nb_features, self.dim_heads, scaling=0
        )
        self._refresh_prepared()

    def __call__(self, q, k, v):
        return fast_attention_pallas(q, k, v, self._proj_t_scaled, self.nb_features)


class ProjectionUpdater:
    def __init__(self, instance, feature_redraw_interval):
        self.instance = instance
        self.feature_redraw_interval = feature_redraw_interval
        self.calls_since_last_redraw = 0
        self.training = True

    def fix_projections_(self):
        self.feature_redraw_interval = None

    def redraw_projections(self, key):
        if not self.training:
            return
        if (self.feature_redraw_interval is not None
                and self.calls_since_last_redraw >= self.feature_redraw_interval):
            self.instance.redraw_projection_matrix(key)
            self.calls_since_last_redraw = 0
            return
        self.calls_since_last_redraw += 1


# ----------------------------------------------------------------------------
if __name__ == "__main__":
    key = jax.random.PRNGKey(0)
    k_proj, k_proj2, k_q, k_k, k_v = jax.random.split(key, 5)

    B, H, N, D = 2, 2, 8, 16          # batch, heads, seq, head-dim
    q = jax.random.normal(k_q, (B, H, N, D), jnp.float32)
    k = jax.random.normal(k_k, (B, H, N, D), jnp.float32)
    v = jax.random.normal(k_v, (B, H, N, D), jnp.float32)

    # Recommended configuration: nb_features a multiple of 128 (lane-dense intermediates).
    fast_attn = FastAttentionModule(dim_heads=D, nb_features=128, key=k_proj)
    updater = ProjectionUpdater(fast_attn, feature_redraw_interval=1000)
    updater.redraw_projections(k_proj)   # bookkeeping path (increments counter)

    out = jax.block_until_ready(fast_attn(q, k, v))
    ref = jax.block_until_ready(fast_attention_ref(q, k, v, fast_attn.projection_matrix))
    assert out.shape == (B, H, N, D)
    # bf16 MXU operands + approx reciprocal -> compare against the f32 reference at a
    # correspondingly looser (but still tight for bf16) tolerance.
    assert jnp.allclose(out, ref, atol=5e-2, rtol=5e-2), "Pallas mismatch (M=128)"

    # Non-multiple-of-128 feature count exercises the lane-padding / masking path.
    fast_attn64 = FastAttentionModule(dim_heads=D, nb_features=64, key=k_proj2)
    out64 = jax.block_until_ready(fast_attn64(q, k, v))
    ref64 = jax.block_until_ready(
        fast_attention_ref(q, k, v, fast_attn64.projection_matrix)
    )
    assert jnp.allclose(out64, ref64, atol=5e-2, rtol=5e-2), "Pallas mismatch (M=64)"

    print("KERNEL_OK")
</pallas_src>

<mosaic_0001>
module attributes {stable_mosaic.version = 11 : i64} {
  func.func @_fast_attention_kernel(%arg0: i32, %arg1: memref<16x128xbf16, #tpu.memory_space<vmem>>, %arg2: memref<2x8x16xf32, #tpu.memory_space<vmem>>, %arg3: memref<2x8x16xf32, #tpu.memory_space<vmem>>, %arg4: memref<2x8x16xf32, #tpu.memory_space<vmem>>, %arg5: memref<2x8x16xf32, #tpu.memory_space<vmem>>) attributes {dimension_semantics = [#tpu.dimension_semantics<parallel>], iteration_bounds = array<i64: 2>, scalar_prefetch = 0 : i64, scratch_operands = 0 : i64, tpu.core_type = #tpu.core_type<tc>, window_params = [{pipeline_mode = #tpu.pipeline_mode<synchronous>, transform_indices = @transform_0, window_bounds = array<i64: 16, 128>}, {transform_indices = @transform_1, window_bounds = array<i64: 2, 8, 16>}, {transform_indices = @transform_2, window_bounds = array<i64: 2, 8, 16>}, {transform_indices = @transform_3, window_bounds = array<i64: 2, 8, 16>}, {transform_indices = @transform_4, window_bounds = array<i64: 2, 8, 16>}]} {
    %c0 = arith.constant 0 : index
    %c0_0 = arith.constant 0 : index
    %c0_1 = arith.constant 0 : index
    %0 = vector.load %arg2[%c0, %c0_0, %c0_1] : memref<2x8x16xf32, #tpu.memory_space<vmem>>, vector<2x8x16xf32>
    %c0_2 = arith.constant 0 : index
    %c0_3 = arith.constant 0 : index
    %c0_4 = arith.constant 0 : index
    %1 = vector.load %arg3[%c0_2, %c0_3, %c0_4] : memref<2x8x16xf32, #tpu.memory_space<vmem>>, vector<2x8x16xf32>
    %c0_5 = arith.constant 0 : index
    %c0_6 = arith.constant 0 : index
    %c0_7 = arith.constant 0 : index
    %2 = vector.load %arg4[%c0_5, %c0_6, %c0_7] : memref<2x8x16xf32, #tpu.memory_space<vmem>>, vector<2x8x16xf32>
    %c0_8 = arith.constant 0 : index
    %c0_9 = arith.constant 0 : index
    %3 = vector.load %arg1[%c0_8, %c0_9] : memref<16x128xbf16, #tpu.memory_space<vmem>>, vector<16x128xbf16>
    %4 = vector.shape_cast %0 : vector<2x8x16xf32> to vector<16x16xf32>
    %5 = arith.truncf %4 : vector<16x16xf32> to vector<16x16xbf16>
    %6 = vector.shape_cast %1 : vector<2x8x16xf32> to vector<16x16xf32>
    %7 = arith.truncf %6 : vector<16x16xf32> to vector<16x16xbf16>
    %cst = arith.constant dense<0.000000e+00> : vector<16x128xf32>
    %8 = tpu.matmul %5, %3, %cst {dimension_numbers = #tpu.dot_dimension_numbers<[1], [0], [0], [1], [0, 0, 1, 1], [], []>} : vector<16x16xbf16>, vector<16x128xbf16>, vector<16x128xf32> -> vector<16x128xf32>
    %9 = vector.shape_cast %8 : vector<16x128xf32> to vector<2x8x128xf32>
    %cst_10 = arith.constant dense<0.000000e+00> : vector<16x128xf32>
    %10 = tpu.matmul %7, %3, %cst_10 {dimension_numbers = #tpu.dot_dimension_numbers<[1], [0], [0], [1], [0, 0, 1, 1], [], []>} : vector<16x16xbf16>, vector<16x128xbf16>, vector<16x128xf32> -> vector<16x128xf32>
    %11 = vector.shape_cast %10 : vector<16x128xf32> to vector<2x8x128xf32>
    %12 = arith.mulf %0, %0 : vector<2x8x16xf32>
    %cst_11 = arith.constant dense<0.000000e+00> : vector<2x8xf32>
    %13 = vector.multi_reduction <add>, %12, %cst_11 [2] : vector<2x8x16xf32> to vector<2x8xf32>
    %14 = vector.shape_cast %13 : vector<2x8xf32> to vector<2x8x1xf32>
    %cst_12 = arith.constant 1.250000e-01 : f32
    %15 = vector.broadcast %cst_12 : f32 to vector<2x8x1xf32>
    %16 = arith.mulf %14, %15 : vector<2x8x1xf32>
    %17 = arith.mulf %1, %1 : vector<2x8x16xf32>
    %cst_13 = arith.constant dense<0.000000e+00> : vector<2x8xf32>
    %18 = vector.multi_reduction <add>, %17, %cst_13 [2] : vector<2x8x16xf32> to vector<2x8xf32>
    %19 = vector.shape_cast %18 : vector<2x8xf32> to vector<2x8x1xf32>
    %cst_14 = arith.constant 1.250000e-01 : f32
    %20 = vector.broadcast %cst_14 : f32 to vector<2x8x1xf32>
    %21 = arith.mulf %19, %20 : vector<2x8x1xf32>
    %cst_15 = arith.constant dense<0xFF800000> : vector<2x8xf32>
    %22 = vector.multi_reduction <maximumf>, %9, %cst_15 [2] : vector<2x8x128xf32> to vector<2x8xf32>
    %23 = vector.shape_cast %22 : vector<2x8xf32> to vector<2x8x1xf32>
    %cst_16 = arith.constant dense<0xFF800000> : vector<2x8xf32>
    %24 = vector.multi_reduction <maximumf>, %11, %cst_16 [2] : vector<2x8x128xf32> to vector<2x8xf32>
    %25 = vector.shape_cast %24 : vector<2x8xf32> to vector<2x8x1xf32>
    %cst_17 = arith.constant dense<0xFF800000> : vector<2x1xf32>
    %26 = vector.multi_reduction <maximumf>, %25, %cst_17 [1] : vector<2x8x1xf32> to vector<2x1xf32>
    %27 = vector.shape_cast %26 : vector<2x1xf32> to vector<2x1x1xf32>
    %28 = vector.broadcast %16 : vector<2x8x1xf32> to vector<2x8x128xf32>
    %29 = arith.subf %9, %28 : vector<2x8x128xf32>
    %30 = vector.broadcast %23 : vector<2x8x1xf32> to vector<2x8x128xf32>
    %31 = arith.subf %29, %30 : vector<2x8x128xf32>
    %cst_18 = arith.constant -2.42601514 : f32
    %32 = vector.broadcast %cst_18 : f32 to vector<2x8x128xf32>
    %33 = arith.addf %31, %32 : vector<2x8x128xf32>
    %34 = math.exp %33 : vector<2x8x128xf32>
    %cst_19 = arith.constant 8.83883513E-6 : f32
    %35 = vector.broadcast %cst_19 : f32 to vector<2x8x128xf32>
    %36 = arith.addf %34, %35 : vector<2x8x128xf32>
    %37 = vector.broadcast %21 : vector<2x8x1xf32> to vector<2x8x128xf32>
    %38 = arith.subf %11, %37 : vector<2x8x128xf32>
    %39 = vector.broadcast %27 : vector<2x1x1xf32> to vector<2x8x128xf32>
    %40 = arith.subf %38, %39 : vector<2x8x128xf32>
    %cst_20 = arith.constant -2.42601514 : f32
    %41 = vector.broadcast %cst_20 : f32 to vector<2x8x128xf32>
    %42 = arith.addf %40, %41 : vector<2x8x128xf32>
    %43 = math.exp %42 : vector<2x8x128xf32>
    %cst_21 = arith.constant 8.83883513E-6 : f32
    %44 = vector.broadcast %cst_21 : f32 to vector<2x8x128xf32>
    %45 = arith.addf %43, %44 : vector<2x8x128xf32>
    %cst_22 = arith.constant 1.000000e+00 : f32
    %46 = vector.broadcast %cst_22 : f32 to vector<2x8x1xf32>
    %47 = tpu.concatenate %2, %46 in 2 : vector<2x8x16xf32>, vector<2x8x1xf32> -> vector<2x8x17xf32>
    %48 = arith.truncf %36 : vector<2x8x128xf32> to vector<2x8x128xbf16>
    %49 = arith.truncf %45 : vector<2x8x128xf32> to vector<2x8x128xbf16>
    %50 = arith.truncf %47 : vector<2x8x17xf32> to vector<2x8x17xbf16>
    "tpu.trace_start"() <{level = 10 : i32, message = "gnm,gnd->gmd"}> : () -> ()
    %cst_23 = arith.constant dense<0.000000e+00> : vector<2x128x17xf32>
    %51 = tpu.matmul %49, %50, %cst_23 {dimension_numbers = #tpu.dot_dimension_numbers<[1], [1], [2], [2], [0, 0, 0, 2, 1, 2], [0], [0]>} : vector<2x8x128xbf16>, vector<2x8x17xbf16>, vector<2x128x17xf32> -> vector<2x128x17xf32>
    "tpu.trace_stop"() : () -> ()
    %52 = arith.truncf %51 : vector<2x128x17xf32> to vector<2x128x17xbf16>
    "tpu.trace_start"() <{level = 10 : i32, message = "gnm,gmd->gnd"}> : () -> ()
    %cst_24 = arith.constant dense<0.000000e+00> : vector<2x8x17xf32>
    %53 = tpu.matmul %48, %52, %cst_24 {dimension_numbers = #tpu.dot_dimension_numbers<[2], [1], [1], [2], [0, 0, 0, 1, 1, 2], [0], [0]>} : vector<2x8x128xbf16>, vector<2x128x17xbf16>, vector<2x8x17xf32> -> vector<2x8x17xf32>
    "tpu.trace_stop"() : () -> ()
    %54 = vector.extract_strided_slice %53 {offsets = [0, 0, 0], sizes = [2, 8, 16], strides = [1, 1, 1]} : vector<2x8x17xf32> to vector<2x8x16xf32>
    %55 = vector.extract_strided_slice %53 {offsets = [0, 0, 16], sizes = [2, 8, 1], strides = [1, 1, 1]} : vector<2x8x17xf32> to vector<2x8x1xf32>
    %cst_25 = arith.constant 0.000000e+00 : f32
    %56 = vector.broadcast %cst_25 : f32 to vector<2x8x1xf32>
    %57 = arith.cmpf oeq, %55, %56 : vector<2x8x1xf32>
    %cst_26 = arith.constant 9.99999974E-6 : f32
    %58 = vector.broadcast %cst_26 : f32 to vector<2x8x1xf32>
    %59 = arith.select %57, %58, %55 : vector<2x8x1xi1>, vector<2x8x1xf32>
    %60 = tpu.reciprocal %59 {approx = true} : vector<2x8x1xf32> -> vector<2x8x1xf32>
    %61 = vector.broadcast %60 : vector<2x8x1xf32> to vector<2x8x16xf32>
    %62 = arith.mulf %54, %61 : vector<2x8x16xf32>
    %c0_27 = arith.constant 0 : index
    %c0_28 = arith.constant 0 : index
    %c0_29 = arith.constant 0 : index
    %63 = vector.load %arg5[%c0_27, %c0_28, %c0_29] : memref<2x8x16xf32, #tpu.memory_space<vmem>>, vector<2x8x16xf32>
    tpu.vector_store %arg5[%c0_27, %c0_28, %c0_29], %62 {strides = array<i32>} : memref<2x8x16xf32, #tpu.memory_space<vmem>>, vector<2x8x16xf32>,
    return
  }
  func.func @transform_0(%arg0: i32) -> (i32, i32) {
    %c0_i32 = arith.constant 0 : i32
    %c0_i32_0 = arith.constant 0 : i32
    %c0_i32_1 = arith.constant 0 : i32
    return %c0_i32, %c0_i32_0 : i32, i32
  }
  func.func @transform_1(%arg0: i32) -> (i32, i32, i32) {
    %c0_i32 = arith.constant 0 : i32
    %c0_i32_0 = arith.constant 0 : i32
    %c0_i32_1 = arith.constant 0 : i32
    return %arg0, %c0_i32, %c0_i32_0 : i32, i32, i32
  }
  func.func @transform_2(%arg0: i32) -> (i32, i32, i32) {
    %c0_i32 = arith.constant 0 : i32
    %c0_i32_0 = arith.constant 0 : i32
    %c0_i32_1 = arith.constant 0 : i32
    return %arg0, %c0_i32, %c0_i32_0 : i32, i32, i32
  }
  func.func @transform_3(%arg0: i32) -> (i32, i32, i32) {
    %c0_i32 = arith.constant 0 : i32
    %c0_i32_0 = arith.constant 0 : i32
    %c0_i32_1 = arith.constant 0 : i32
    return %arg0, %c0_i32, %c0_i32_0 : i32, i32, i32
  }
  func.func @transform_4(%arg0: i32) -> (i32, i32, i32) {
    %c0_i32 = arith.constant 0 : i32
    %c0_i32_0 = arith.constant 0 : i32
    %c0_i32_1 = arith.constant 0 : i32
    return %arg0, %c0_i32, %c0_i32_0 : i32, i32, i32
  }
}

</mosaic_0001>

<llo_original>
// kernel: tpu_custom_call.1
$region0: #{tpu_custom_call.1}
  #allocation0 [shape = 'u32[]', space=smem, size = 0x4, offset = 0x4, fixed_abs, tag = 'smem constant byte address 0x4 - core index']
  #allocation1 [shape = 'u32[144,128]{1,0:T(1,128)}', space=vmem, size = 0x12000, scoped, tag = 'internal scratch']
  %s0 = inlined_call_operand.hbm [shape: bf16[16,128], index: 0, kind: input, shape index: {}]
  %s1 = inlined_call_operand.hbm [shape: f32[4,8,16], index: 1, kind: input, shape index: {}]
  %s2 = inlined_call_operand.hbm [shape: f32[4,8,16], index: 2, kind: input, shape index: {}]
  %s3 = inlined_call_operand.hbm [shape: f32[4,8,16], index: 3, kind: input, shape index: {}]
  %s4 = inlined_call_operand.hbm [shape: f32[4,8,16], index: 4, kind: output, shape index: {}]
  %s5 = sld [smem:[#allocation0]]
  $region65: #{tpu_custom_call.1} parent=0
    _
  %s7 = ssub.s32 1, %s5
  %s8 = scalar_select 0, %s7, %s5
  $region1: #{tpu_custom_call.1} parent=0
    #allocation2 [shape = 'u8[4096]{0}', space=vmem, size = 0x1000, scoped, tag = 'input window, operand 0, single buffered']
    #allocation3 [shape = 's32[2]{0}', space=sflag, size = 0x8, scoped, tag = 'scoped memory for tpu_custom_call.1']
    #allocation4 [shape = 's32[2]{0}', space=sflag, size = 0x8, scoped, tag = 'scoped memory for tpu_custom_call.1']
    #allocation5 [shape = 'u8[16384]{0}', space=vmem, size = 0x4000, scoped, tag = 'input window, operand 1']
    #allocation6 [shape = 's32[2]{0}', space=sflag, size = 0x8, scoped, tag = 'scoped memory for tpu_custom_call.1']
    #allocation7 [shape = 'u8[16384]{0}', space=vmem, size = 0x4000, scoped, tag = 'input window, operand 2']
    #allocation8 [shape = 'u8[16384]{0}', space=vmem, size = 0x4000, scoped, tag = 'input window, operand 3']
    #allocation9 [shape = 's32[2]{0}', space=sflag, size = 0x8, scoped, tag = 'scoped memory for tpu_custom_call.1']
    #allocation10 [shape = 'u8[16384]{0}', space=vmem, size = 0x4000, scoped, tag = 'output window, operand 0']
    %9 = vsyncpa [#allocation3], 0
    %10 = vsyncpa [#allocation6], 0
    %s11 = scalar_lea.sflag [#allocation6], 1
    %12 = vsyncpa %s11, 0
    %13 = vsyncpa [#allocation9], 0
    %s14 = scalar_lea.sflag [#allocation9], 1
    %15 = vsyncpa %s14, 0
    %16 = vsyncpa [#allocation4], 0
    %s17 = scalar_lea.sflag [#allocation4], 1
    %18 = vsyncpa %s17, 0
    loop: start=0, step=1, limit=4
    $region2: #{tpu_custom_call.1} parent=1 // loop_pre_header
      _
    $region3: #{tpu_custom_call.1} parent=1 // loop_header
      %s20 = sphi 0, %s24
      %p21 = scmp.ge.s32.totalorder %s20, 4
      %s28 = sphi 0, %s28
      %s30 = sphi 0, %s28
      %s31 = sphi 0, %s30
      %s45 = sphi 0, %s31
      %s51 = sphi 0, %s53
      %s54 = sphi 0, %s51
      %s55 = sphi 0, %s54
      %s71 = sphi 0, %s55
      %s77 = sphi 0, %s79
      %s80 = sphi 0, %s77
      %s81 = sphi 0, %s80
      %s97 = sphi 0, %s81
      %s103 = sphi 0, %s105
      %s106 = sphi 0, %s103
      %s107 = sphi 0, %s106
      %s123 = sphi 0, %s107
      %s129 = sphi 0, %s131
      %s132 = sphi 0, %s129
      %s133 = sphi 0, %s132
      %s149 = sphi 0, %s133
    $region4: #{tpu_custom_call.1} parent=1 // loop_header_branch
      %23 = sbr.rel (%p21) target = $region8
    $region5: #{tpu_custom_call.1} parent=1 // loop_body
      %s25 = ssub.s32 %s20, 1
      %s26 = ssub.s32 %s20, 2
      %s27 = sadd.s32 %s20, 1
      %s29 = sadd.s32 %s28, 1
      %p32 = scmp.eq.s32.totalorder %s20, 1
      %p33 = scmp.ne.s32.totalorder %s28, %s30
      %p34 = scmp.eq.s32.totalorder %s20, 0
      %p35 = por %p33, %p34
      %p36 = scmp.ne.s32.totalorder %s28, %s30
      %p37 = scmp.eq.s32.totalorder %s25, 1
      %p38 = por %p36, %p37
      %p39 = scmp.ne.s32.totalorder %s30, %s31
      %p40 = scmp.eq.s32.totalorder %s25, 0
      %p41 = por %p39, %p40
      %p42 = scmp.ne.s32.totalorder %s30, %s31
      %p43 = scmp.eq.s32.totalorder %s26, 1
      %p44 = por %p42, %p43
      %p46 = scmp.ne.s32.totalorder %s31, %s45
      %p47 = scmp.eq.s32.totalorder %s26, 0
      %p48 = por %p46, %p47
      %s49 = ssub.s32 %s20, %s27
      %p50 = scmp.eq.s32.totalorder %s49, 0
      %s52 = sadd.s32 %s51, 1
      %s53 = scalar_select %p50, %s51, %s52
      %p56 = pneg %p50
      %p57 = scmp.eq.s32.totalorder %s20, 1
      %p58 = por %p56, %p57
      %p59 = scmp.ne.s32.totalorder %s51, %s54
      %p60 = scmp.eq.s32.totalorder %s20, 0
      %p61 = por %p59, %p60
      %p62 = scmp.ne.s32.totalorder %s51, %s54
      %p63 = scmp.eq.s32.totalorder %s25, 1
      %p64 = por %p62, %p63
      %p65 = scmp.ne.s32.totalorder %s54, %s55
      %p66 = scmp.eq.s32.totalorder %s25, 0
      %p67 = por %p65, %p66
      %p68 = scmp.ne.s32.totalorder %s54, %s55
      %p69 = scmp.eq.s32.totalorder %s26, 1
      %p70 = por %p68, %p69
      %p72 = scmp.ne.s32.totalorder %s55, %s71
      %p73 = scmp.eq.s32.totalorder %s26, 0
      %p74 = por %p72, %p73
      %s75 = ssub.s32 %s20, %s27
      %p76 = scmp.eq.s32.totalorder %s75, 0
      %s78 = sadd.s32 %s77, 1
      %s79 = scalar_select %p76, %s77, %s78
      %p82 = pneg %p76
      %p83 = scmp.eq.s32.totalorder %s20, 1
      %p84 = por %p82, %p83
      %p85 = scmp.ne.s32.totalorder %s77, %s80
      %p86 = scmp.eq.s32.totalorder %s20, 0
      %p87 = por %p85, %p86
      %p88 = scmp.ne.s32.totalorder %s77, %s80
      %p89 = scmp.eq.s32.totalorder %s25, 1
      %p90 = por %p88, %p89
      %p91 = scmp.ne.s32.totalorder %s80, %s81
      %p92 = scmp.eq.s32.totalorder %s25, 0
      %p93 = por %p91, %p92
      %p94 = scmp.ne.s32.totalorder %s80, %s81
      %p95 = scmp.eq.s32.totalorder %s26, 1
      %p96 = por %p94, %p95
      %p98 = scmp.ne.s32.totalorder %s81, %s97
      %p99 = scmp.eq.s32.totalorder %s26, 0
      %p100 = por %p98, %p99
      %s101 = ssub.s32 %s20, %s27
      %p102 = scmp.eq.s32.totalorder %s101, 0
      %s104 = sadd.s32 %s103, 1
      %s105 = scalar_select %p102, %s103, %s104
      %p108 = pneg %p102
      %p109 = scmp.eq.s32.totalorder %s20, 1
      %p110 = por %p108, %p109
      %p111 = scmp.ne.s32.totalorder %s103, %s106
      %p112 = scmp.eq.s32.totalorder %s20, 0
      %p113 = por %p111, %p112
      %p114 = scmp.ne.s32.totalorder %s103, %s106
      %p115 = scmp.eq.s32.totalorder %s25, 1
      %p116 = por %p114, %p115
      %p117 = scmp.ne.s32.totalorder %s106, %s107
      %p118 = scmp.eq.s32.totalorder %s25, 0
      %p119 = por %p117, %p118
      %p120 = scmp.ne.s32.totalorder %s106, %s107
      %p121 = scmp.eq.s32.totalorder %s26, 1
      %p122 = por %p120, %p121
      %p124 = scmp.ne.s32.totalorder %s107, %s123
      %p125 = scmp.eq.s32.totalorder %s26, 0
      %p126 = por %p124, %p125
      %s127 = ssub.s32 %s20, %s27
      %p128 = scmp.eq.s32.totalorder %s127, 0
      %s130 = sadd.s32 %s129, 1
      %s131 = scalar_select %p128, %s129, %s130
      %p134 = pneg %p128
      %p135 = scmp.eq.s32.totalorder %s20, 1
      %p136 = por %p134, %p135
      %p137 = scmp.ne.s32.totalorder %s129, %s132
      %p138 = scmp.eq.s32.totalorder %s20, 0
      %p139 = por %p137, %p138
      %p140 = scmp.ne.s32.totalorder %s129, %s132
      %p141 = scmp.eq.s32.totalorder %s25, 1
      %p142 = por %p140, %p141
      %p143 = scmp.ne.s32.totalorder %s132, %s133
      %p144 = scmp.eq.s32.totalorder %s25, 0
      %p145 = por %p143, %p144
      %p146 = scmp.ne.s32.totalorder %s132, %s133
      %p147 = scmp.eq.s32.totalorder %s26, 1
      %p148 = por %p146, %p147
      %p150 = scmp.ne.s32.totalorder %s133, %s149
      %p151 = scmp.eq.s32.totalorder %s26, 0
      %p152 = por %p150, %p151
      %p153 = scmp.le.s32.totalorder 1, %s20
      %p154 = scmp.lt.s32.totalorder %s20, 3
      %p155 = pnand %p153, %p154
      %p156 = pneg %p155
      // Predicated region
      $region9: #{tpu_custom_call.1} parent=5 // pred_check
        _
      $region10: #{tpu_custom_call.1} parent=5 // pred_check_branch
        %158 = sbr.rel (%p155) target = $region12
      $region11: #{tpu_custom_call.1} parent=5 // pred_region
        %s159 = ssub.s32 %s20, 1
        // Predicated region
        $region13: #{tpu_custom_call.1} parent=11 // pred_check
          %p160 = pneg %p41
        $region14: #{tpu_custom_call.1} parent=11 // pred_check_branch
          %162 = sbr.rel (%p160) target = $region16
        $region15: #{tpu_custom_call.1} parent=11 // pred_region
          %s164 = ssub.s32 128, 128
          %165 = vsyncadd [#allocation3], %s164
          %s166 = sshll.u32 [#allocation2], 4
          %s167 = int_to_ptr.vmem [resolvable:$true] %s166
          %172 = dma.hbm_to_vmem [thread:$0]  %s0, 128, %s167, [#allocation3], 64, 64, 4
        $region16: #{tpu_custom_call.1} parent=11 // pred_fallthru
          _
      $region12: #{tpu_custom_call.1} parent=5 // pred_fallthru
        _
      %p173 = scmp.lt.s32.totalorder %s20, 2
      // Predicated region
      $region17: #{tpu_custom_call.1} parent=5 // pred_check
        %p174 = pneg %p173
      $region18: #{tpu_custom_call.1} parent=5 // pred_check_branch
        %176 = sbr.rel (%p174) target = $region20
      $region19: #{tpu_custom_call.1} parent=5 // pred_region
        // Predicated region
        $region21: #{tpu_custom_call.1} parent=19 // pred_check
          %p177 = pneg %p61
        $region22: #{tpu_custom_call.1} parent=19 // pred_check_branch
          %179 = sbr.rel (%p177) target = $region24
        $region23: #{tpu_custom_call.1} parent=19 // pred_region
          %s180 = sand.u32 %s20, 1
          %s181 = scalar_lea.sflag [#allocation6], %s180
          %s182 = sand.u32 %s51, 1
          %s183 = smul.addr %s182, 16
          %s184 = scalar_lea.vmem [#allocation5], %s183
          %s185 = smul.u32 2, %s20
          %s187 = ssub.s32 256, 256
          %188 = vsyncadd %s181, %s187
          %s189 = smul.addr %s185, 128
          %s190 = scalar_lea.hbm %s1, %s189
          %s191 = sshll.u32 %s184, 4
          %s192 = int_to_ptr.vmem [resolvable:$true] %s191
          %197 = dma.hbm_to_vmem [thread:$0]  %s190, 256, %s192, %s181, 128, 128, 8
        $region24: #{tpu_custom_call.1} parent=19 // pred_fallthru
          _
        // Predicated region
        $region25: #{tpu_custom_call.1} parent=19 // pred_check
          %p198 = pneg %p87
        $region26: #{tpu_custom_call.1} parent=19 // pred_check_branch
          %200 = sbr.rel (%p198) target = $region28
        $region27: #{tpu_custom_call.1} parent=19 // pred_region
          %s201 = sand.u32 %s20, 1
          %s202 = scalar_lea.sflag [#allocation6], %s201
          %s203 = sand.u32 %s77, 1
          %s204 = smul.addr %s203, 16
          %s205 = scalar_lea.vmem [#allocation7], %s204
          %s206 = smul.u32 2, %s20
          %s208 = ssub.s32 256, 256
          %209 = vsyncadd %s202, %s208
          %s210 = smul.addr %s206, 128
          %s211 = scalar_lea.hbm %s2, %s210
          %s212 = sshll.u32 %s205, 4
          %s213 = int_to_ptr.vmem [resolvable:$true] %s212
          %218 = dma.hbm_to_vmem [thread:$0]  %s211, 256, %s213, %s202, 128, 128, 8
        $region28: #{tpu_custom_call.1} parent=19 // pred_fallthru
          _
        // Predicated region
        $region29: #{tpu_custom_call.1} parent=19 // pred_check
          %p219 = pneg %p113
        $region30: #{tpu_custom_call.1} parent=19 // pred_check_branch
          %221 = sbr.rel (%p219) target = $region32
        $region31: #{tpu_custom_call.1} parent=19 // pred_region
          %s222 = sand.u32 %s103, 1
          %s223 = scalar_lea.sflag [#allocation9], %s222
          %s224 = sand.u32 %s103, 1
          %s225 = smul.addr %s224, 16
          %s226 = scalar_lea.vmem [#allocation8], %s225
          %s227 = smul.u32 2, %s20
          %s229 = ssub.s32 256, 256
          %230 = vsyncadd %s223, %s229
          %s231 = smul.addr %s227, 128
          %s232 = scalar_lea.hbm %s3, %s231
          %s233 = sshll.u32 %s226, 4
          %s234 = int_to_ptr.vmem [resolvable:$true] %s233
          %239 = dma.hbm_to_vmem [thread:$0]  %s232, 256, %s234, %s223, 128, 128, 8
        $region32: #{tpu_custom_call.1} parent=19 // pred_fallthru
          _
      $region20: #{tpu_custom_call.1} parent=5 // pred_fallthru
        _
      %p240 = scmp.le.s32.totalorder 1, %s20
      %p241 = scmp.lt.s32.totalorder %s20, 3
      %p242 = pnand %p240, %p241
      %p243 = pneg %p242
      // Predicated region
      $region33: #{tpu_custom_call.1} parent=5 // pred_check
        _
      $region34: #{tpu_custom_call.1} parent=5 // pred_check_branch
        %245 = sbr.rel (%p242) target = $region36
      $region35: #{tpu_custom_call.1} parent=5 // pred_region
        %s246 = ssub.s32 %s20, 1
        // Predicated region
        $region37: #{tpu_custom_call.1} parent=35 // pred_check
          %p247 = pneg %p41
        $region38: #{tpu_custom_call.1} parent=35 // pred_check_branch
          %249 = sbr.rel (%p247) target = $region40
        $region39: #{tpu_custom_call.1} parent=35 // pred_region
          %250 = dma.done [#allocation3], 128
        $region40: #{tpu_custom_call.1} parent=35 // pred_fallthru
          _
        %s251 = sand.u32 %s25, 1
        %s252 = scalar_lea.sflag [#allocation6], %s251
        %s253 = sand.u32 %s54, 1
        %s254 = smul.addr %s253, 16
        %s255 = scalar_lea.vmem [#allocation5], %s254
        // Predicated region
        $region41: #{tpu_custom_call.1} parent=35 // pred_check
          %p256 = pneg %p67
        $region42: #{tpu_custom_call.1} parent=35 // pred_check_branch
          %258 = sbr.rel (%p256) target = $region44
        $region43: #{tpu_custom_call.1} parent=35 // pred_region
          %259 = dma.done %s252, 256
        $region44: #{tpu_custom_call.1} parent=35 // pred_fallthru
          _
        %s260 = sand.u32 %s25, 1
        %s261 = scalar_lea.sflag [#allocation6], %s260
        %s262 = sand.u32 %s80, 1
        %s263 = smul.addr %s262, 16
        %s264 = scalar_lea.vmem [#allocation7], %s263
        // Predicated region
        $region45: #{tpu_custom_call.1} parent=35 // pred_check
          %p265 = pneg %p93
        $region46: #{tpu_custom_call.1} parent=35 // pred_check_branch
          %267 = sbr.rel (%p265) target = $region48
        $region47: #{tpu_custom_call.1} parent=35 // pred_region
          %268 = dma.done %s261, 256
        $region48: #{tpu_custom_call.1} parent=35 // pred_fallthru
          _
        %s269 = sand.u32 %s106, 1
        %s270 = scalar_lea.sflag [#allocation9], %s269
        %s271 = sand.u32 %s106, 1
        %s272 = smul.addr %s271, 16
        %s273 = scalar_lea.vmem [#allocation8], %s272
        // Predicated region
        $region49: #{tpu_custom_call.1} parent=35 // pred_check
          %p274 = pneg %p119
        $region50: #{tpu_custom_call.1} parent=35 // pred_check_branch
          %276 = sbr.rel (%p274) target = $region52
        $region51: #{tpu_custom_call.1} parent=35 // pred_region
          %277 = dma.done %s270, 256
        $region52: #{tpu_custom_call.1} parent=35 // pred_fallthru
          _
        %p278 = pneg %p41
        %p279 = pneg %p38
        %s280 = sand.u32 %s25, 1
        %s281 = scalar_lea.sflag [#allocation6], %s280
        %s282 = sand.u32 %s54, 1
        %s283 = smul.addr %s282, 16
        %s284 = scalar_lea.vmem [#allocation5], %s283
        %p285 = pneg %p67
        %p286 = pneg %p64
        %s287 = sand.u32 %s25, 1
        %s288 = scalar_lea.sflag [#allocation6], %s287
        %s289 = sand.u32 %s80, 1
        %s290 = smul.addr %s289, 16
        %s291 = scalar_lea.vmem [#allocation7], %s290
        %p292 = pneg %p93
        %p293 = pneg %p90
        %s294 = sand.u32 %s106, 1
        %s295 = scalar_lea.sflag [#allocation9], %s294
        %s296 = sand.u32 %s106, 1
        %s297 = smul.addr %s296, 16
        %s298 = scalar_lea.vmem [#allocation8], %s297
        %p299 = pneg %p119
        %p300 = pneg %p116
        %p301 = pneg %p145
        %p302 = pneg %p142
        %s303 = sand.u32 %s132, 1
        %s304 = scalar_lea.sflag [#allocation4], %s303
        %s305 = sand.u32 %s132, 1
        %s306 = smul.addr %s305, 16
        %s307 = scalar_lea.vmem [#allocation10], %s306
        %s308 = smul.u32 2, %s25
        %s309 = smul.u32 2, %s25
        %s310 = smul.u32 2, %s25
        %s311 = smul.u32 2, %s25
        %v313 = vld [vmem:[%s255] sm:$0xff]
        %v314 = vld [vmem:[%s255 + $0x8] sm:$0xff]
        %v315 = vld [vmem:[%s264] sm:$0xff]
        %v316 = vld [vmem:[%s264 + $0x8] sm:$0xff]
        %v317 = vld [vmem:[%s273] sm:$0xff]
        %v318 = vld [vmem:[%s273 + $0x8] sm:$0xff]
        %v319 = vld [vmem:[#allocation2] sm:$0xf]
        %v320 = vld [vmem:[#allocation2 + $0x4] sm:$0xf]
        %v321 = vpack.c.bf16 %v314, %v313
        %v322 = vpack.c.bf16 %v316, %v315
        %v325 = vunpack.c.l.b16 %v319
        %v326 = vunpack.c.l.b16 %v320
        %v327 = vpack.c.b16 %v326, %v325
        %vm329 = vcmask 130048
        %v331 = vsel %vm329, %v321, 0
        %333 = vmatprep.subr.bf16.mxu0 0
        %334 = vmatpush1.bf16.msra.mxu0 %v327
        %335 = vmatprep.subr.bf16.mxu0 0
        %336 = vmatpush1.bf16.msra.mxu0 0
        %337 = vmatprep.subr.bf16.mxu0 0
        %338 = vmatpush1.bf16.msra.mxu0 0
        %339 = vmatprep.subr.bf16.mxu0 0
        %340 = vmatpush1.bf16.msra.mxu0 0
        %341 = vmatprep.subr.bf16.mxu0 0
        %342 = vmatpush1.bf16.msra.mxu0 0
        %343 = vmatprep.subr.bf16.mxu0 0
        %344 = vmatpush1.bf16.msra.mxu0 0
        %345 = vmatprep.subr.bf16.mxu0 0
        %346 = vmatpush1.bf16.msra.mxu0 0
        %347 = vmatprep.subr.bf16.mxu0 0
        %348 = vmatpush1.bf16.msra.mxu0 0
        %349 = vmatprep.subr.bf16.mxu0 0
        %350 = vmatpush1.bf16.msra.mxu0 0
        %351 = vmatprep.subr.bf16.mxu0 0
        %352 = vmatpush1.bf16.msra.mxu0 0
        %353 = vmatprep.subr.bf16.mxu0 0
        %354 = vmatpush1.bf16.msra.mxu0 0
        %355 = vmatprep.subr.bf16.mxu0 0
        %356 = vmatpush1.bf16.msra.mxu0 0
        %357 = vmatprep.subr.bf16.mxu0 0
        %358 = vmatpush1.bf16.msra.mxu0 0
        %359 = vmatprep.subr.bf16.mxu0 0
        %360 = vmatpush1.bf16.msra.mxu0 0
        %361 = vmatprep.subr.bf16.mxu0 0
        %362 = vmatpush1.bf16.msra.mxu0 0
        %363 = vmatprep.subr.bf16.mxu0 0
        %364 = vmatpush1.bf16.msra.mxu0 0
        %365 = vmatprep.mubr.bf16.mxu0 0
        %366 = vmatmul.mubr.bf16.gmra.mrb[0].mxu0 %v331
        %v367 = vpop.f32.mrb[0].mxu0
        %v368 = vadd.f32 0.0, %v367
        %v369 = vpop.f32.mrb[0].mxu0
        %v370 = vpop.f32.mrb[0].mxu0
        %v371 = vadd.f32 0.0, %v370
        %v372 = vpop.f32.mrb[0].mxu0
        %373 = vdwg.mxu0
        %v375 = vsel %vm329, %v322, 0
        %377 = vmatprep.subr.bf16.mxu0 0
        %378 = vmatpush1.bf16.msra.mxu0 %v327
        %379 = vmatprep.subr.bf16.mxu0 0
        %380 = vmatpush1.bf16.msra.mxu0 0
        %381 = vmatprep.subr.bf16.mxu0 0
        %382 = vmatpush1.bf16.msra.mxu0 0
        %383 = vmatprep.subr.bf16.mxu0 0
        %384 = vmatpush1.bf16.msra.mxu0 0
        %385 = vmatprep.subr.bf16.mxu0 0
        %386 = vmatpush1.bf16.msra.mxu0 0
        %387 = vmatprep.subr.bf16.mxu0 0
        %388 = vmatpush1.bf16.msra.mxu0 0
        %389 = vmatprep.subr.bf16.mxu0 0
        %390 = vmatpush1.bf16.msra.mxu0 0
        %391 = vmatprep.subr.bf16.mxu0 0
        %392 = vmatpush1.bf16.msra.mxu0 0
        %393 = vmatprep.subr.bf16.mxu0 0
        %394 = vmatpush1.bf16.msra.mxu0 0
        %395 = vmatprep.subr.bf16.mxu0 0
        %396 = vmatpush1.bf16.msra.mxu0 0
        %397 = vmatprep.subr.bf16.mxu0 0
        %398 = vmatpush1.bf16.msra.mxu0 0
        %399 = vmatprep.subr.bf16.mxu0 0
        %400 = vmatpush1.bf16.msra.mxu0 0
        %401 = vmatprep.subr.bf16.mxu0 0
        %402 = vmatpush1.bf16.msra.mxu0 0
        %403 = vmatprep.subr.bf16.mxu0 0
        %404 = vmatpush1.bf16.msra.mxu0 0
        %405 = vmatprep.subr.bf16.mxu0 0
        %406 = vmatpush1.bf16.msra.mxu0 0
        %407 = vmatprep.subr.bf16.mxu0 0
        %408 = vmatpush1.bf16.msra.mxu0 0
        %409 = vmatprep.mubr.bf16.mxu0 0
        %410 = vmatmul.mubr.bf16.gmra.mrb[0].mxu0 %v375
        %v411 = vpop.f32.mrb[0].mxu0
        %v412 = vadd.f32 0.0, %v411
        %v413 = vpop.f32.mrb[0].mxu0
        %v414 = vpop.f32.mrb[0].mxu0
        %v415 = vadd.f32 0.0, %v414
        %v416 = vpop.f32.mrb[0].mxu0
        %417 = vdwg.mxu0
        %v418 = vmul.f32 %v313, %v313
        %v419 = vmul.f32 %v314, %v314
        %v420 = vsel %vm329, %v418, 0.0
        %421 = vadd.xlane.f32.xlu0 %v420
        %v422 = vpop.xlane.xlu0 %421
        %v423 = vsel %vm329, %v419, 0.0
        %424 = vadd.xlane.f32.xlu0 %v423
        %v425 = vpop.xlane.xlu0 %424
        %v426 = vmul.f32 %v422, 0.125
        %v427 = vmul.f32 %v425, 0.125
        %v428 = vmul.f32 %v315, %v315
        %v429 = vmul.f32 %v316, %v316
        %v430 = vsel %vm329, %v428, 0.0
        %431 = vadd.xlane.f32.xlu0 %v430
        %v432 = vpop.xlane.xlu0 %431
        %v433 = vsel %vm329, %v429, 0.0
        %434 = vadd.xlane.f32.xlu0 %v433
        %v435 = vpop.xlane.xlu0 %434
        %v436 = vmul.f32 %v432, 0.125
        %v437 = vmul.f32 %v435, 0.125
        %438 = vmax.xlane.f32.xlu0 %v368
        %v439 = vpop.xlane.xlu0 %438
        %440 = vmax.xlane.f32.xlu0 %v371
        %v441 = vpop.xlane.xlu0 %440
        %442 = vmax.xlane.f32.xlu0 %v412
        %v443 = vpop.xlane.xlu0 %442
        %444 = vmax.xlane.f32.xlu0 %v415
        %v445 = vpop.xlane.xlu0 %444
        %v446 = vrot.slane %v443, 4
        %v447 = vmax.f32 %v443, %v446
        %v448 = vrot.slane %v447, 2
        %v449 = vmax.f32 %v447, %v448
        %v450 = vrot.slane %v449, 1
        %v451 = vmax.f32 %v449, %v450
        %v452 = vrot.slane %v445, 4
        %v453 = vmax.f32 %v445, %v452
        %v454 = vrot.slane %v453, 2
        %v455 = vmax.f32 %v453, %v454
        %v456 = vrot.slane %v455, 1
        %v457 = vmax.f32 %v455, %v456
        %v458 = vsub.f32 %v368, %v426
        %v459 = vsub.f32 %v371, %v427
        %v460 = vsub.f32 %v458, %v439
        %v461 = vsub.f32 %v459, %v441
        %v462 = vadd.f32 %v460, -2.4260151
        %v463 = vadd.f32 %v461, -2.4260151
        %v464 = vmul.f32 %v462, 1.442695
        %v465 = vpow.pop %v464
        %v466 = vmul.f32 %v463, 1.442695
        %v467 = vpow.pop %v466
        %v468 = vadd.f32 %v465, 8.838835e-06
        %v469 = vadd.f32 %v467, 8.838835e-06
        %v470 = vsub.f32 %v412, %v436
        %v471 = vsub.f32 %v415, %v437
        %v472 = vsub.f32 %v470, %v451
        %v473 = vsub.f32 %v471, %v457
        %v474 = vadd.f32 %v472, -2.4260151
        %v475 = vadd.f32 %v473, -2.4260151
        %v476 = vmul.f32 %v474, 1.442695
        %v477 = vpow.pop %v476
        %v478 = vmul.f32 %v475, 1.442695
        %v479 = vpow.pop %v478
        %v480 = vadd.f32 %v477, 8.838835e-06
        %v481 = vadd.f32 %v479, 8.838835e-06
        %v482 = vsel %vm329, %v317, 1.0
        %v483 = vsel %vm329, %v318, 1.0
        %v484 = vpack.c.bf16 %v468, %v468
        %v485 = vpack.c.bf16 %v469, %v469
        %v486 = vpack.c.bf16 %v480, %v480
        %v487 = vpack.c.bf16 %v481, %v481
        %v488 = vpack.c.bf16 %v482, %v482
        %v489 = vpack.c.bf16 %v483, %v483
        %490 = vxpose.xlu0.c.b16.start [1/8] %v486, 128
        %491 = vxpose.xlu0.c.b16.cont [2/8] 0, 128
        %492 = vxpose.xlu0.c.b16.cont [3/8] 0, 128
        %493 = vxpose.xlu0.c.b16.cont [4/8] 0, 128
        %494 = vxpose.xlu0.c.b16.cont [5/8] 0, 128
        %495 = vxpose.xlu0.c.b16.cont [6/8] 0, 128
        %496 = vxpose.xlu0.c.b16.cont [7/8] 0, 128
        %497 = vxpose.xlu0.c.b16.end [8/8] 0, 128
        %v498 = vpop.trf.xlu0
        %v499 = vpop.trf.xlu0
        %v500 = vpop.trf.xlu0
        %v501 = vpop.trf.xlu0
        %v502 = vpop.trf.xlu0
        %v503 = vpop.trf.xlu0
        %v504 = vpop.trf.xlu0
        %v505 = vpop.trf.xlu0
        %vm506 = vcmask 64512
        %v508 = vsel %vm506, %v498, 0
        %v511 = vsel %vm506, %v499, 0
        %v514 = vsel %vm506, %v500, 0
        %v517 = vsel %vm506, %v501, 0
        %v520 = vsel %vm506, %v502, 0
        %v523 = vsel %vm506, %v503, 0
        %v526 = vsel %vm506, %v504, 0
        %v529 = vsel %vm506, %v505, 0
        %vm531 = vcmask 1043456
        %v533 = vsel %vm531, %v488, 0
        %535 = vmatprep.subr.bf16.mxu0 0
        %536 = vmatpush1.bf16.msra.mxu0 %v533
        %537 = vmatprep.subr.bf16.mxu0 0
        %538 = vmatpush1.bf16.msra.mxu0 0
        %539 = vmatprep.subr.bf16.mxu0 0
        %540 = vmatpush1.bf16.msra.mxu0 0
        %541 = vmatprep.subr.bf16.mxu0 0
        %542 = vmatpush1.bf16.msra.mxu0 0
        %543 = vmatprep.subr.bf16.mxu0 0
        %544 = vmatpush1.bf16.msra.mxu0 0
        %545 = vmatprep.subr.bf16.mxu0 0
        %546 = vmatpush1.bf16.msra.mxu0 0
        %547 = vmatprep.subr.bf16.mxu0 0
        %548 = vmatpush1.bf16.msra.mxu0 0
        %549 = vmatprep.subr.bf16.mxu0 0
        %550 = vmatpush1.bf16.msra.mxu0 0
        %551 = vmatprep.subr.bf16.mxu0 0
        %552 = vmatpush1.bf16.msra.mxu0 0
        %553 = vmatprep.subr.bf16.mxu0 0
        %554 = vmatpush1.bf16.msra.mxu0 0
        %555 = vmatprep.subr.bf16.mxu0 0
        %556 = vmatpush1.bf16.msra.mxu0 0
        %557 = vmatprep.subr.bf16.mxu0 0
        %558 = vmatpush1.bf16.msra.mxu0 0
        %559 = vmatprep.subr.bf16.mxu0 0
        %560 = vmatpush1.bf16.msra.mxu0 0
        %561 = vmatprep.subr.bf16.mxu0 0
        %562 = vmatpush1.bf16.msra.mxu0 0
        %563 = vmatprep.subr.bf16.mxu0 0
        %564 = vmatpush1.bf16.msra.mxu0 0
        %565 = vmatprep.subr.bf16.mxu0 0
        %566 = vmatpush1.bf16.msra.mxu0 0
        %567 = vmatprep.mubr.bf16.mxu0 0
        %568 = vmatmul.mubr.bf16.gmra.mrb[0].mxu0 %v508
        %v569 = vpop.f32.mrb[0].mxu0
        %v570 = vadd.f32 0.0, %v569
        %v571 = vpop.f32.mrb[0].mxu0
        %v572 = vpop.f32.mrb[0].mxu0
        %v573 = vadd.f32 0.0, %v572
        %v574 = vpop.f32.mrb[0].mxu0
        %575 = vmatprep.mubr.bf16.mxu0 0
        %576 = vmatmul.mubr.bf16.gmra.mrb[0].mxu0 %v511
        %v577 = vpop.f32.mrb[0].mxu0
        %v578 = vadd.f32 0.0, %v577
        %v579 = vpop.f32.mrb[0].mxu0
        %v580 = vpop.f32.mrb[0].mxu0
        %v581 = vadd.f32 0.0, %v580
        %v582 = vpop.f32.mrb[0].mxu0
        %583 = vmatprep.mubr.bf16.mxu0 0
        %584 = vmatmul.mubr.bf16.gmra.mrb[0].mxu0 %v514
        %v585 = vpop.f32.mrb[0].mxu0
        %v586 = vadd.f32 0.0, %v585
        %v587 = vpop.f32.mrb[0].mxu0
        %v588 = vpop.f32.mrb[0].mxu0
        %v589 = vadd.f32 0.0, %v588
        %v590 = vpop.f32.mrb[0].mxu0
        %591 = vmatprep.mubr.bf16.mxu0 0
        %592 = vmatmul.mubr.bf16.gmra.mrb[0].mxu0 %v517
        %v593 = vpop.f32.mrb[0].mxu0
        %v594 = vadd.f32 0.0, %v593
        %v595 = vpop.f32.mrb[0].mxu0
        %v596 = vpop.f32.mrb[0].mxu0
        %v597 = vadd.f32 0.0, %v596
        %v598 = vpop.f32.mrb[0].mxu0
        %599 = vmatprep.mubr.bf16.mxu0 0
        %600 = vmatmul.mubr.bf16.gmra.mrb[0].mxu0 %v520
        %v601 = vpop.f32.mrb[0].mxu0
        %v602 = vadd.f32 0.0, %v601
        %v603 = vpop.f32.mrb[0].mxu0
        %v604 = vpop.f32.mrb[0].mxu0
        %v605 = vadd.f32 0.0, %v604
        %v606 = vpop.f32.mrb[0].mxu0
        %607 = vmatprep.mubr.bf16.mxu0 0
        %608 = vmatmul.mubr.bf16.gmra.mrb[0].mxu0 %v523
        %v609 = vpop.f32.mrb[0].mxu0
        %v610 = vadd.f32 0.0, %v609
        %v611 = vpop.f32.mrb[0].mxu0
        %v612 = vpop.f32.mrb[0].mxu0
        %v613 = vadd.f32 0.0, %v612
        %v614 = vpop.f32.mrb[0].mxu0
        %615 = vmatprep.mubr.bf16.mxu0 0
        %616 = vmatmul.mubr.bf16.gmra.mrb[0].mxu0 %v526
        %v617 = vpop.f32.mrb[0].mxu0
        %v618 = vadd.f32 0.0, %v617
        %v619 = vpop.f32.mrb[0].mxu0
        %v620 = vpop.f32.mrb[0].mxu0
        %v621 = vadd.f32 0.0, %v620
        %v622 = vpop.f32.mrb[0].mxu0
        %623 = vmatprep.mubr.bf16.mxu0 0
        %624 = vmatmul.mubr.bf16.gmra.mrb[0].mxu0 %v529
        %v625 = vpop.f32.mrb[0].mxu0
        %v626 = vadd.f32 0.0, %v625
        %v627 = vpop.f32.mrb[0].mxu0
        %v628 = vpop.f32.mrb[0].mxu0
        %v629 = vadd.f32 0.0, %v628
        %v630 = vpop.f32.mrb[0].mxu0
        %631 = vdwg.mxu0
        %632 = vxpose.xlu0.c.b16.start [1/8] %v487, 128
        %633 = vxpose.xlu0.c.b16.cont [2/8] 0, 128
        %634 = vxpose.xlu0.c.b16.cont [3/8] 0, 128
        %635 = vxpose.xlu0.c.b16.cont [4/8] 0, 128
        %636 = vxpose.xlu0.c.b16.cont [5/8] 0, 128
        %637 = vxpose.xlu0.c.b16.cont [6/8] 0, 128
        %638 = vxpose.xlu0.c.b16.cont [7/8] 0, 128
        %639 = vxpose.xlu0.c.b16.end [8/8] 0, 128
        %v640 = vpop.trf.xlu0
        %v641 = vpop.trf.xlu0
        %v642 = vpop.trf.xlu0
        %v643 = vpop.trf.xlu0
        %v644 = vpop.trf.xlu0
        %v645 = vpop.trf.xlu0
        %v646 = vpop.trf.xlu0
        %v647 = vpop.trf.xlu0
        %v649 = vsel %vm506, %v640, 0
        %v652 = vsel %vm506, %v641, 0
        %v655 = vsel %vm506, %v642, 0
        %v658 = vsel %vm506, %v643, 0
        %v661 = vsel %vm506, %v644, 0
        %v664 = vsel %vm506, %v645, 0
        %v667 = vsel %vm506, %v646, 0
        %v670 = vsel %vm506, %v647, 0
        %v673 = vsel %vm531, %v489, 0
        %675 = vmatprep.subr.bf16.mxu0 0
        %676 = vmatpush1.bf16.msra.mxu0 %v673
        %677 = vmatprep.subr.bf16.mxu0 0
        %678 = vmatpush1.bf16.msra.mxu0 0
        %679 = vmatprep.subr.bf16.mxu0 0
        %680 = vmatpush1.bf16.msra.mxu0 0
        %681 = vmatprep.subr.bf16.mxu0 0
        %682 = vmatpush1.bf16.msra.mxu0 0
        %683 = vmatprep.subr.bf16.mxu0 0
        %684 = vmatpush1.bf16.msra.mxu0 0
        %685 = vmatprep.subr.bf16.mxu0 0
        %686 = vmatpush1.bf16.msra.mxu0 0
        %687 = vmatprep.subr.bf16.mxu0 0
        %688 = vmatpush1.bf16.msra.mxu0 0
        %689 = vmatprep.subr.bf16.mxu0 0
        %690 = vmatpush1.bf16.msra.mxu0 0
        %691 = vmatprep.subr.bf16.mxu0 0
        %692 = vmatpush1.bf16.msra.mxu0 0
        %693 = vmatprep.subr.bf16.mxu0 0
        %694 = vmatpush1.bf16.msra.mxu0 0
        %695 = vmatprep.subr.bf16.mxu0 0
        %696 = vmatpush1.bf16.msra.mxu0 0
        %697 = vmatprep.subr.bf16.mxu0 0
        %698 = vmatpush1.bf16.msra.mxu0 0
        %699 = vmatprep.subr.bf16.mxu0 0
        %700 = vmatpush1.bf16.msra.mxu0 0
        %701 = vmatprep.subr.bf16.mxu0 0
        %702 = vmatpush1.bf16.msra.mxu0 0
        %703 = vmatprep.subr.bf16.mxu0 0
        %704 = vmatpush1.bf16.msra.mxu0 0
        %705 = vmatprep.subr.bf16.mxu0 0
        %706 = vmatpush1.bf16.msra.mxu0 0
        %707 = vmatprep.mubr.bf16.mxu0 0
        %708 = vmatmul.mubr.bf16.gmra.mrb[0].mxu0 %v649
        %v709 = vpop.f32.mrb[0].mxu0
        %v710 = vadd.f32 0.0, %v709
        %v711 = vpop.f32.mrb[0].mxu0
        %v712 = vpop.f32.mrb[0].mxu0
        %v713 = vadd.f32 0.0, %v712
        %v714 = vpop.f32.mrb[0].mxu0
        %715 = vmatprep.mubr.bf16.mxu0 0
        %716 = vmatmul.mubr.bf16.gmra.mrb[0].mxu0 %v652
        %v717 = vpop.f32.mrb[0].mxu0
        %v718 = vadd.f32 0.0, %v717
        %v719 = vpop.f32.mrb[0].mxu0
        %v720 = vpop.f32.mrb[0].mxu0
        %v721 = vadd.f32 0.0, %v720
        %v722 = vpop.f32.mrb[0].mxu0
        %723 = vmatprep.mubr.bf16.mxu0 0
        %724 = vmatmul.mubr.bf16.gmra.mrb[0].mxu0 %v655
        %v725 = vpop.f32.mrb[0].mxu0
        %v726 = vadd.f32 0.0, %v725
        %v727 = vpop.f32.mrb[0].mxu0
        %v728 = vpop.f32.mrb[0].mxu0
        %v729 = vadd.f32 0.0, %v728
        %v730 = vpop.f32.mrb[0].mxu0
        %731 = vmatprep.mubr.bf16.mxu0 0
        %732 = vmatmul.mubr.bf16.gmra.mrb[0].mxu0 %v658
        %v733 = vpop.f32.mrb[0].mxu0
        %v734 = vadd.f32 0.0, %v733
        %v735 = vpop.f32.mrb[0].mxu0
        %v736 = vpop.f32.mrb[0].mxu0
        %v737 = vadd.f32 0.0, %v736
        %v738 = vpop.f32.mrb[0].mxu0
        %739 = vmatprep.mubr.bf16.mxu0 0
        %740 = vmatmul.mubr.bf16.gmra.mrb[0].mxu0 %v661
        %v741 = vpop.f32.mrb[0].mxu0
        %v742 = vadd.f32 0.0, %v741
        %v743 = vpop.f32.mrb[0].mxu0
        %v744 = vpop.f32.mrb[0].mxu0
        %v745 = vadd.f32 0.0, %v744
        %v746 = vpop.f32.mrb[0].mxu0
        %747 = vmatprep.mubr.bf16.mxu0 0
        %748 = vmatmul.mubr.bf16.gmra.mrb[0].mxu0 %v664
        %v749 = vpop.f32.mrb[0].mxu0
        %v750 = vadd.f32 0.0, %v749
        %v751 = vpop.f32.mrb[0].mxu0
        %v752 = vpop.f32.mrb[0].mxu0
        %v753 = vadd.f32 0.0, %v752
        %v754 = vpop.f32.mrb[0].mxu0
        %755 = vmatprep.mubr.bf16.mxu0 0
        %756 = vmatmul.mubr.bf16.gmra.mrb[0].mxu0 %v667
        %v757 = vpop.f32.mrb[0].mxu0
        %v758 = vadd.f32 0.0, %v757
        %v759 = vpop.f32.mrb[0].mxu0
        %v760 = vpop.f32.mrb[0].mxu0
        %v761 = vadd.f32 0.0, %v760
        %v762 = vpop.f32.mrb[0].mxu0
        %763 = vmatprep.mubr.bf16.mxu0 0
        %764 = vmatmul.mubr.bf16.gmra.mrb[0].mxu0 %v670
        %v765 = vpop.f32.mrb[0].mxu0
        %v766 = vadd.f32 0.0, %v765
        %v767 = vpop.f32.mrb[0].mxu0
        %v768 = vpop.f32.mrb[0].mxu0
        %v769 = vadd.f32 0.0, %v768
        %v770 = vpop.f32.mrb[0].mxu0
        %771 = vdwg.mxu0
        %v772 = vpack.c.bf16 %v573, %v570
        %v773 = vpack.c.bf16 %v581, %v578
        %v774 = vpack.c.bf16 %v589, %v586
        %v775 = vpack.c.bf16 %v597, %v594
        %v776 = vpack.c.bf16 %v605, %v602
        %v777 = vpack.c.bf16 %v613, %v610
        %v778 = vpack.c.bf16 %v621, %v618
        %v779 = vpack.c.bf16 %v629, %v626
        %v780 = vpack.c.bf16 %v713, %v710
        %v781 = vpack.c.bf16 %v721, %v718
        %v782 = vpack.c.bf16 %v729, %v726
        %v783 = vpack.c.bf16 %v737, %v734
        %v784 = vpack.c.bf16 %v745, %v742
        %v785 = vpack.c.bf16 %v753, %v750
        %v786 = vpack.c.bf16 %v761, %v758
        %v787 = vpack.c.bf16 %v769, %v766
        %788 = vmatprep.subr.bf16.mxu0 0
        %789 = vmatpush1.bf16.msra.mxu0 %v772
        %790 = vmatprep.subr.bf16.mxu0 0
        %791 = vmatpush1.bf16.msra.mxu0 %v773
        %792 = vmatprep.subr.bf16.mxu0 0
        %793 = vmatpush1.bf16.msra.mxu0 %v774
        %794 = vmatprep.subr.bf16.mxu0 0
        %795 = vmatpush1.bf16.msra.mxu0 %v775
        %796 = vmatprep.subr.bf16.mxu0 0
        %797 = vmatpush1.bf16.msra.mxu0 %v776
        %798 = vmatprep.subr.bf16.mxu0 0
        %799 = vmatpush1.bf16.msra.mxu0 %v777
        %800 = vmatprep.subr.bf16.mxu0 0
        %801 = vmatpush1.bf16.msra.mxu0 %v778
        %802 = vmatprep.subr.bf16.mxu0 0
        %803 = vmatpush1.bf16.msra.mxu0 %v779
        %804 = vmatprep.subr.bf16.mxu0 0
        %805 = vmatpush1.bf16.msra.mxu0 0
        %806 = vmatprep.subr.bf16.mxu0 0
        %807 = vmatpush1.bf16.msra.mxu0 0
        %808 = vmatprep.subr.bf16.mxu0 0
        %809 = vmatpush1.bf16.msra.mxu0 0
        %810 = vmatprep.subr.bf16.mxu0 0
        %811 = vmatpush1.bf16.msra.mxu0 0
        %812 = vmatprep.subr.bf16.mxu0 0
        %813 = vmatpush1.bf16.msra.mxu0 0
        %814 = vmatprep.subr.bf16.mxu0 0
        %815 = vmatpush1.bf16.msra.mxu0 0
        %816 = vmatprep.subr.bf16.mxu0 0
        %817 = vmatpush1.bf16.msra.mxu0 0
        %818 = vmatprep.subr.bf16.mxu0 0
        %819 = vmatpush1.bf16.msra.mxu0 0
        %820 = vmatprep.mubr.bf16.mxu0 0
        %821 = vmatmul.mubr.bf16.gmra.mrb[0].mxu0 %v484
        %v822 = vpop.f32.mrb[0].mxu0
        %v823 = vadd.f32 0.0, %v822
        %v824 = vpop.f32.mrb[0].mxu0
        %v825 = vpop.f32.mrb[0].mxu0
        %v826 = vpop.f32.mrb[0].mxu0
        %827 = vdwg.mxu0
        %828 = vmatprep.subr.bf16.mxu0 0
        %829 = vmatpush1.bf16.msra.mxu0 %v780
        %830 = vmatprep.subr.bf16.mxu0 0
        %831 = vmatpush1.bf16.msra.mxu0 %v781
        %832 = vmatprep.subr.bf16.mxu0 0
        %833 = vmatpush1.bf16.msra.mxu0 %v782
        %834 = vmatprep.subr.bf16.mxu0 0
        %835 = vmatpush1.bf16.msra.mxu0 %v783
        %836 = vmatprep.subr.bf16.mxu0 0
        %837 = vmatpush1.bf16.msra.mxu0 %v784
        %838 = vmatprep.subr.bf16.mxu0 0
        %839 = vmatpush1.bf16.msra.mxu0 %v785
        %840 = vmatprep.subr.bf16.mxu0 0
        %841 = vmatpush1.bf16.msra.mxu0 %v786
        %842 = vmatprep.subr.bf16.mxu0 0
        %843 = vmatpush1.bf16.msra.mxu0 %v787
        %844 = vmatprep.subr.bf16.mxu0 0
        %845 = vmatpush1.bf16.msra.mxu0 0
        %846 = vmatprep.subr.bf16.mxu0 0
        %847 = vmatpush1.bf16.msra.mxu0 0
        %848 = vmatprep.subr.bf16.mxu0 0
        %849 = vmatpush1.bf16.msra.mxu0 0
        %850 = vmatprep.subr.bf16.mxu0 0
        %851 = vmatpush1.bf16.msra.mxu0 0
        %852 = vmatprep.subr.bf16.mxu0 0
        %853 = vmatpush1.bf16.msra.mxu0 0
        %854 = vmatprep.subr.bf16.mxu0 0
        %855 = vmatpush1.bf16.msra.mxu0 0
        %856 = vmatprep.subr.bf16.mxu0 0
        %857 = vmatpush1.bf16.msra.mxu0 0
        %858 = vmatprep.subr.bf16.mxu0 0
        %859 = vmatpush1.bf16.msra.mxu0 0
        %860 = vmatprep.mubr.bf16.mxu0 0
        %861 = vmatmul.mubr.bf16.gmra.mrb[0].mxu0 %v485
        %v862 = vpop.f32.mrb[0].mxu0
        %v863 = vadd.f32 0.0, %v862
        %v864 = vpop.f32.mrb[0].mxu0
        %v865 = vpop.f32.mrb[0].mxu0
        %v866 = vpop.f32.mrb[0].mxu0
        %867 = vdwg.mxu0
        %vm868 = vcmp.eq.f32.partialorder %v823, 0.0
        %vm869 = vcmp.eq.f32.partialorder %v863, 0.0
        %v870 = vsel %vm868, 1e-05, %v823
        %v871 = vsel %vm869, 1e-05, %v863
        %v872 = vrcp.pop %v870
        %v873 = vrcp.pop %v871
        %875 = vset.pattern.permute.xlu0 16
        %876 = vperm.xlu0 %875, %v872
        %v877 = vpop.permute.xlu0 %876
        %880 = vset.pattern.permute.xlu0 16
        %881 = vperm.xlu0 %880, %v873
        %v882 = vpop.permute.xlu0 %881
        %v884 = vmul.f32 %v823, %v877
        %v885 = vmul.f32 %v863, %v882
        %886 = vst.msk [vmem:[%s307] sm:$0xff] %vm329, %v884
        %887 = vst.msk [vmem:[%s307 + $0x8] sm:$0xff] %vm329, %v885
        %s888 = sand.u32 %s132, 1
        %s889 = scalar_lea.sflag [#allocation4], %s888
        %s890 = sand.u32 %s132, 1
        %s891 = smul.addr %s890, 16
        %s892 = scalar_lea.vmem [#allocation10], %s891
        // Predicated region
        $region53: #{tpu_custom_call.1} parent=35 // pred_check
          %p893 = pneg %p142
        $region54: #{tpu_custom_call.1} parent=35 // pred_check_branch
          %895 = sbr.rel (%p893) target = $region56
        $region55: #{tpu_custom_call.1} parent=35 // pred_region
          %s896 = smul.u32 2, %s25
          %s898 = ssub.s32 256, 256
          %899 = vsyncadd %s889, %s898
          %s900 = smul.addr %s896, 128
          %s901 = scalar_lea.hbm %s4, %s900
          %s902 = sshll.u32 %s892, 4
          %s903 = int_to_ptr.vmem [resolvable:$true] %s902
          %908 = dma.vmem_to_hbm [thread:$0]  %s903, 256, %s901, %s889, 128, 128, 8
        $region56: #{tpu_custom_call.1} parent=35 // pred_fallthru
          _
      $region36: #{tpu_custom_call.1} parent=5 // pred_fallthru
        _
      %p909 = scmp.le.s32.totalorder 2, %s20
      // Predicated region
      $region57: #{tpu_custom_call.1} parent=5 // pred_check
        %p910 = pneg %p909
      $region58: #{tpu_custom_call.1} parent=5 // pred_check_branch
        %912 = sbr.rel (%p910) target = $region60
      $region59: #{tpu_custom_call.1} parent=5 // pred_region
        %s913 = ssub.s32 %s20, 2
        // Predicated region
        $region61: #{tpu_custom_call.1} parent=59 // pred_check
          %p914 = pneg %p148
        $region62: #{tpu_custom_call.1} parent=59 // pred_check_branch
          %916 = sbr.rel (%p914) target = $region64
        $region63: #{tpu_custom_call.1} parent=59 // pred_region
          %s917 = sand.u32 %s133, 1
          %s918 = scalar_lea.sflag [#allocation4], %s917
          %s919 = sand.u32 %s133, 1
          %s920 = smul.addr %s919, 16
          %s921 = scalar_lea.vmem [#allocation10], %s920
          %922 = dma.done %s918, 256
        $region64: #{tpu_custom_call.1} parent=59 // pred_fallthru
          _
      $region60: #{tpu_custom_call.1} parent=5 // pred_fallthru
        _
    $region6: #{tpu_custom_call.1} parent=1 // loop_footer
      %s24 = sadd.s32 1, %s20
    $region7: #{tpu_custom_call.1} parent=1 // loop_footer_branch
      %19 = sbr.rel target = $region3
    $region8: #{tpu_custom_call.1} parent=1 // loop_exit
      _
    %923 = vsyncpa [#allocation3], 1
    %s924 = scalar_lea.sflag [#allocation3], 1
    %925 = vsyncpa %s924, 1
    %926 = vsyncpa [#allocation6], 1
    %s927 = scalar_lea.sflag [#allocation6], 1
    %928 = vsyncpa %s927, 1
    %929 = vsyncpa [#allocation9], 1
    %s930 = scalar_lea.sflag [#allocation9], 1
    %931 = vsyncpa %s930, 1
    %932 = vsyncpa [#allocation4], 1
    %s933 = scalar_lea.sflag [#allocation4], 1
    %934 = vsyncpa %s933, 1

</llo_original>
